<compile_context>
chip_gen: v7x
topology: tpu7x:2x2x1
jax: 0.10.0
libtpu: 0.0.40
codegen_flags: <defaults>
</compile_context>

<pallas_src>
import functools

import jax
import jax.numpy as jnp
from jax.experimental import pallas as pl
from jax.experimental.pallas import tpu as pltpu


def _round_up(x: int, m: int) -> int:
    return (x + m - 1) // m * m


def _cdiv(a: int, b: int) -> int:
    return -(-a // b)


# --------------------------------------------------------------------------
# Pallas kernel: one grid step == (one sequence tile) x (TB batch elements).
# --------------------------------------------------------------------------
def _vit_embed_kernel(patches_ref, w_ref, pos_ref, o_ref):
    """
    patches_ref: (TB, TS, P)  bf16  (cls slot row, if any, is all zeros)
    w_ref      : (P, E)       bf16  (grid-invariant -> fetched once)
    pos_ref    : (TS, E)      f32   (pos + bias, cls folded into row 0;
                                     batch-innermost grid -> one fetch per seq tile)
    o_ref      : (TB, TS, E)  out dtype (ragged last seq tile masked by Pallas)
    """
    w = w_ref[...]
    pos = pos_ref[...]
    for b in range(patches_ref.shape[0]):          # TB is small & static -> unrolled
        proj = jnp.dot(patches_ref[b], w, preferred_element_type=jnp.float32)  # MXU
        o_ref[b] = (proj + pos).astype(o_ref.dtype)


# --------------------------------------------------------------------------
# Wrapper
# --------------------------------------------------------------------------
def vit_embedding_forward(x, params, *, patch_height, patch_width,
                          use_cls_token, out_dtype=jnp.float32):
    """x: (B, C, H, W) float32.  Returns (B, N(+1), E) in out_dtype."""
    B, C, H, W = x.shape
    ph, pw = patch_height, patch_width
    assert H % ph == 0 and W % pw == 0, "dims must be divisible by patch size"
    nh, nw = H // ph, W // pw
    N = nh * nw
    P = C * ph * pw

    w = params["proj_weight"]                 # (P, E) f32
    b = params["proj_bias"].reshape(-1)       # (E,)   f32
    pos = params["pos_embed"]                 # (S_out, E) f32
    E = w.shape[1]
    lead = 1 if use_cls_token else 0
    S_out = N + lead
    out_bytes = jnp.dtype(out_dtype).itemsize

    # ---- sequence-tile selection: multiple-of-8 tile minimizing padding ----
    # Budget is conservative so the schedule is valid on v7x (64 MiB VMEM)
    # as well as v5e/v6e (128 MiB).
    BUF_BUDGET = 28 * 1024 * 1024
    s8 = _round_up(S_out, 8)
    per_row = 2 * (P * 2 + E * 4 + E * out_bytes)   # dbl-buffered patches+pos+out / row
    avail = BUF_BUDGET - 2 * P * E * 2              # minus dbl-buffered weight
    ts_cap = max(8, min(1024, s8, (avail // max(per_row, 1)) // 8 * 8))

    TS, best_pad = 8, None
    for ts in range(8, ts_cap + 1, 8):
        s_pad = _cdiv(S_out, ts) * ts
        if best_pad is None or s_pad < best_pad or (s_pad == best_pad and ts > TS):
            TS, best_pad = ts, s_pad
    S_pad = _cdiv(S_out, TS) * TS
    n_seq = S_pad // TS

    # ---- batch blocking: biggest divisor of B that fits budget and keeps ----
    # ---- at least 2 grid steps (v7x megacore).                          ----
    TB = 1
    for cand in range(B, 0, -1):
        if B % cand:
            continue
        steps = (B // cand) * n_seq
        if steps < 2 and cand > 1:
            continue
        est = 2 * P * E * 2 + 2 * TS * E * 4 + cand * TS * (2 * P * 2 + 2 * E * out_bytes)
        if est <= BUF_BUDGET:
            TB = cand
            break
    n_b = B // TB

    vmem_est = 2 * P * E * 2 + 2 * TS * E * 4 + TB * TS * (2 * P * 2 + 2 * E * out_bytes)
    vmem_limit = int(min(max(vmem_est + 8 * 1024 * 1024, 16 * 1024 * 1024),
                         40 * 1024 * 1024))

    # ---- patch extraction glue (torch unfold/permute ordering) -------------
    # bf16 cast FIRST so the reshape/transpose/pad pass moves half the bytes.
    xb = x.astype(jnp.bfloat16)
    patches = xb.reshape(B, C, nh, ph, nw, pw)
    patches = jnp.transpose(patches, (0, 2, 4, 1, 3, 5)).reshape(B, N, P)
    # zero row for the cls slot + trailing zeros up to S_pad; no K padding.
    patches = jnp.pad(patches, ((0, 0), (lead, S_pad - S_out), (0, 0)))

    w_b = w.astype(jnp.bfloat16)              # (P, E), no padding

    # ---- fold bias (and cls token) into the positional embedding -----------
    pos_eff = pos + b[None, :]                        # every real patch row
    if use_cls_token:
        cls = params["cls_token"].reshape(1, E)
        pos_eff = pos_eff.at[0].set(pos[0] + cls[0])  # cls row: no bias
    pos_eff = jnp.pad(pos_eff.astype(jnp.float32), ((0, S_pad - S_out), (0, 0)))

    grid = (n_seq, n_b)                               # batch innermost
    cost = pl.CostEstimate(
        flops=2 * B * S_pad * P * E,
        transcendentals=0,
        bytes_accessed=(B * S_pad * P * 2             # patches (bf16)
                        + P * E * 2                   # weight  (bf16, once)
                        + S_pad * E * 4               # pos     (f32, once)
                        + B * S_out * E * out_bytes)) # output

    out = pl.pallas_call(
        _vit_embed_kernel,
        out_shape=jax.ShapeDtypeStruct((B, S_out, E), out_dtype),
        grid_spec=pltpu.PrefetchScalarGridSpec(
            num_scalar_prefetch=0,
            grid=grid,
            in_specs=[
                # patches tile: varies with (si, bi)
                pl.BlockSpec((TB, TS, P), lambda si, bi: (bi, si, 0)),
                # weight: grid-invariant -> fetched once
                pl.BlockSpec((P, E), lambda si, bi: (0, 0)),
                # pos(+bias,+cls) tile: index changes only when si changes
                # (batch is the innermost grid axis), so it is fetched once
                # per sequence tile instead of once per step.
                pl.BlockSpec((TS, E), lambda si, bi: (si, 0)),
            ],
            out_specs=pl.BlockSpec((TB, TS, E), lambda si, bi: (bi, si, 0)),
        ),
        compiler_params=pltpu.CompilerParams(
            dimension_semantics=("parallel", "parallel"),
            vmem_limit_bytes=vmem_limit),
        cost_estimate=cost,
    )(patches, w_b, pos_eff)

    return out                                        # exact shape, no post-slice


# --------------------------------------------------------------------------
# Deterministic parameter init (synthetic; mirrors the module's shapes)
# --------------------------------------------------------------------------
def init_params(key, *, input_channels, patch_height, patch_width,
                num_patches, embed_dim, use_cls_token):
    P = input_channels * patch_height * patch_width
    k_w, k_b, k_pos, k_cls = jax.random.split(key, 4)

    # nn.Linear(P, embed_dim): uniform(-1/sqrt(P), 1/sqrt(P))
    bound = 1.0 / jnp.sqrt(P)
    w = jax.random.uniform(k_w, (embed_dim, P), jnp.float32, -bound, bound)
    b = jax.random.uniform(k_b, (embed_dim,), jnp.float32, -bound, bound)

    S = num_patches + 1 if use_cls_token else num_patches
    # trunc_normal_(std=0.02) approximated with a clipped normal
    pos = jnp.clip(0.02 * jax.random.normal(k_pos, (S, embed_dim)), -0.04, 0.04)
    cls = (jax.random.normal(k_cls, (1, embed_dim)).astype(jnp.float32)
           if use_cls_token else jnp.zeros((1, embed_dim), jnp.float32))

    return {
        "proj_weight": w.T,                     # (P, E) for x @ W layout
        "proj_bias": b,                         # (E,)
        "pos_embed": pos.astype(jnp.float32),   # (S, E)
        "cls_token": cls,                       # (1, E)
    }


# --------------------------------------------------------------------------
# Pure-JAX reference (mirrors the PyTorch forward)
# --------------------------------------------------------------------------
def reference_forward(x, params, *, patch_height, patch_width, use_cls_token,
                      matmul_dtype=jnp.float32):
    B, C, H, W = x.shape
    ph, pw = patch_height, patch_width
    nh, nw = H // ph, W // pw
    N = nh * nw
    patches = x.reshape(B, C, nh, ph, nw, pw)
    patches = jnp.transpose(patches, (0, 2, 4, 1, 3, 5)).reshape(B, N, -1)
    w = params["proj_weight"]
    emb = jnp.einsum("bnp,pe->bne",
                     patches.astype(matmul_dtype), w.astype(matmul_dtype),
                     preferred_element_type=jnp.float32)
    emb = emb + params["proj_bias"][None, None, :]
    if use_cls_token:
        cls = jnp.broadcast_to(params["cls_token"].reshape(1, 1, -1),
                               (B, 1, emb.shape[-1]))
        emb = jnp.concatenate([cls, emb], axis=1)
    return emb + params["pos_embed"][None]


# --------------------------------------------------------------------------
if __name__ == "__main__":
    B, C, H, W = 2, 4, 16, 16
    PH, PW = 4, 4
    EMBED_DIM = 32
    NUM_PATCHES = (H // PH) * (W // PW)

    key = jax.random.PRNGKey(0)
    k_x, k_p = jax.random.split(key)
    x = jax.random.normal(k_x, (B, C, H, W), jnp.float32)

    for use_cls in (True, False):
        params = init_params(
            k_p, input_channels=C, patch_height=PH, patch_width=PW,
            num_patches=NUM_PATCHES, embed_dim=EMBED_DIM,
            use_cls_token=use_cls)

        fwd = jax.jit(functools.partial(
            vit_embedding_forward, patch_height=PH, patch_width=PW,
            use_cls_token=use_cls))
        out = jax.block_until_ready(fwd(x, params))

        S = NUM_PATCHES + 1 if use_cls else NUM_PATCHES
        assert out.shape == (B, S, EMBED_DIM), out.shape

        # bit-matched reference (same bf16 operand cast, f32 accumulation)
        ref_bf16 = reference_forward(
            x, params, patch_height=PH, patch_width=PW,
            use_cls_token=use_cls, matmul_dtype=jnp.bfloat16)
        # full-f32 reference (PyTorch semantics), loose tolerance for bf16 MXU
        ref_f32 = reference_forward(
            x, params, patch_height=PH, patch_width=PW,
            use_cls_token=use_cls, matmul_dtype=jnp.float32)

        assert jnp.allclose(out, ref_bf16, atol=1e-4, rtol=1e-4), \
            "mismatch vs bf16-matched reference"
        assert jnp.allclose(out, ref_f32, atol=5e-2, rtol=5e-2), \
            "mismatch vs f32 reference"

    print("KERNEL_OK")
</pallas_src>

<mosaic_0001>
module attributes {stable_mosaic.version = 11 : i64} {
  func.func @_vit_embed_kernel(%arg0: i32, %arg1: i32, %arg2: memref<1x24x64xbf16, #tpu.memory_space<vmem>>, %arg3: memref<64x32xbf16, #tpu.memory_space<vmem>>, %arg4: memref<24x32xf32, #tpu.memory_space<vmem>>, %arg5: memref<1x24x32xf32, #tpu.memory_space<vmem>>) attributes {dimension_semantics = [#tpu.dimension_semantics<parallel>, #tpu.dimension_semantics<parallel>], iteration_bounds = array<i64: 1, 2>, scalar_prefetch = 0 : i64, scratch_operands = 0 : i64, tpu.core_type = #tpu.core_type<tc>, window_params = [{transform_indices = @transform_0, window_bounds = array<i64: 1, 24, 64>}, {pipeline_mode = #tpu.pipeline_mode<synchronous>, transform_indices = @transform_1, window_bounds = array<i64: 64, 32>}, {transform_indices = @transform_2, window_bounds = array<i64: 24, 32>}, {transform_indices = @transform_3, window_bounds = array<i64: 1, 24, 32>}]} {
    %c0 = arith.constant 0 : index
    %c0_0 = arith.constant 0 : index
    %0 = vector.load %arg3[%c0, %c0_0] : memref<64x32xbf16, #tpu.memory_space<vmem>>, vector<64x32xbf16>
    %c0_1 = arith.constant 0 : index
    %c0_2 = arith.constant 0 : index
    %1 = vector.load %arg4[%c0_1, %c0_2] : memref<24x32xf32, #tpu.memory_space<vmem>>, vector<24x32xf32>
    %c0_3 = arith.constant 0 : index
    %c0_4 = arith.constant 0 : index
    %c0_5 = arith.constant 0 : index
    %2 = vector.load %arg2[%c0_3, %c0_4, %c0_5] : memref<1x24x64xbf16, #tpu.memory_space<vmem>>, vector<1x24x64xbf16>
    %3 = vector.shape_cast %2 : vector<1x24x64xbf16> to vector<24x64xbf16>
    %cst = arith.constant dense<0.000000e+00> : vector<24x32xf32>
    %4 = tpu.matmul %3, %0, %cst {dimension_numbers = #tpu.dot_dimension_numbers<[1], [0], [0], [1], [0, 0, 1, 1], [], []>} : vector<24x64xbf16>, vector<64x32xbf16>, vector<24x32xf32> -> vector<24x32xf32>
    %5 = arith.addf %4, %1 : vector<24x32xf32>
    %c0_6 = arith.constant 0 : index
    %c0_7 = arith.constant 0 : index
    %c0_8 = arith.constant 0 : index
    %6 = vector.load %arg5[%c0_6, %c0_7, %c0_8] : memref<1x24x32xf32, #tpu.memory_space<vmem>>, vector<1x24x32xf32>
    %7 = vector.shape_cast %6 : vector<1x24x32xf32> to vector<24x32xf32>
    %8 = vector.shape_cast %5 : vector<24x32xf32> to vector<1x24x32xf32>
    tpu.vector_store %arg5[%c0_6, %c0_7, %c0_8], %8 {strides = array<i32>} : memref<1x24x32xf32, #tpu.memory_space<vmem>>, vector<1x24x32xf32>,
    return
  }
  func.func @transform_0(%arg0: i32, %arg1: i32) -> (i32, i32, i32) {
    %c0_i32 = arith.constant 0 : i32
    %c0_i32_0 = arith.constant 0 : i32
    return %arg1, %arg0, %c0_i32 : i32, i32, i32
  }
  func.func @transform_1(%arg0: i32, %arg1: i32) -> (i32, i32) {
    %c0_i32 = arith.constant 0 : i32
    %c0_i32_0 = arith.constant 0 : i32
    %c0_i32_1 = arith.constant 0 : i32
    return %c0_i32, %c0_i32_0 : i32, i32
  }
  func.func @transform_2(%arg0: i32, %arg1: i32) -> (i32, i32) {
    %c0_i32 = arith.constant 0 : i32
    %c0_i32_0 = arith.constant 0 : i32
    return %arg0, %c0_i32 : i32, i32
  }
  func.func @transform_3(%arg0: i32, %arg1: i32) -> (i32, i32, i32) {
    %c0_i32 = arith.constant 0 : i32
    %c0_i32_0 = arith.constant 0 : i32
    return %arg1, %arg0, %c0_i32 : i32, i32, i32
  }
}

</mosaic_0001>

<llo_original>
// kernel: vit_embedding_forward.1
$region0: #{vit_embedding_forward.1}
  #allocation0 [shape = 'u32[]', space=smem, size = 0x4, offset = 0x4, fixed_abs, tag = 'smem constant byte address 0x4 - core index']
  #allocation1 [shape = 'u32[144,128]{1,0:T(1,128)}', space=vmem, size = 0x12000, scoped, tag = 'internal scratch']
  %s0 = inlined_call_operand.vmem [shape: bf16[2,24,64], index: 0, kind: input, shape index: {}]
  %s1 = inlined_call_operand.vmem [shape: bf16[64,32], index: 1, kind: input, shape index: {}]
  %s2 = inlined_call_operand.vmem [shape: f32[24,32], index: 2, kind: input, shape index: {}]
  %s3 = inlined_call_operand.vmem [shape: f32[2,17,32], index: 3, kind: output, shape index: {}]
  %s4 = sld [smem:[#allocation0]]
  $region45: #{vit_embedding_forward.1} parent=0
    _
  %s6 = ssub.s32 1, %s4
  %s7 = scalar_select 0, %s6, %s4
  loop: start=0, step=1, limit=4
  $region2: #{vit_embedding_forward.1} parent=0 // loop_pre_header
    _
  $region3: #{vit_embedding_forward.1} parent=0 // loop_header
    %s9 = sphi 0, %s13
    %p10 = scmp.ge.s32.totalorder %s9, 4
    %s16 = sphi 0, %s28
    %s17 = sphi 0, %s24
    %s18 = sphi 0, %s16
    %s19 = sphi 0, %s17
    %s20 = sphi 0, %s18
    %s21 = sphi 0, %s19
    %s33 = sphi 0, %s35
    %s36 = sphi 0, %s33
    %s37 = sphi 0, %s36
    %s53 = sphi 0, %s37
    %s57 = sphi 0, %s57
    %s59 = sphi 0, %s57
    %s60 = sphi 0, %s59
    %s74 = sphi 0, %s60
    %s80 = sphi 0, %s82
    %s83 = sphi 0, %s80
    %s84 = sphi 0, %s83
    %s100 = sphi 0, %s84
    %s108 = sphi 0, %s110
    %s111 = sphi 0, %s108
    %s112 = sphi 0, %s111
    %s128 = sphi 0, %s112
  $region4: #{vit_embedding_forward.1} parent=0 // loop_header_branch
    %12 = sbr.rel (%p10) target = $region8
  $region5: #{vit_embedding_forward.1} parent=0 // loop_body
    %s14 = ssub.s32 %s9, 1
    %s15 = ssub.s32 %s9, 2
    %s22 = sadd.s32 1, %s17
    %p23 = scmp.ge.s32.totalorder %s22, 2
    %s24 = scalar_select %p23, 0, %s22
    %s25 = sadd.s32 1, %s16
    %s26 = scalar_select %p23, %s25, %s16
    %p27 = scmp.ge.s32.totalorder %s26, 1
    %s28 = scalar_select %p27, 0, %s26
    %s29 = ssub.s32 %s17, %s24
    %s30 = ssub.s32 %s16, %s28
    %s31 = sor.u32 %s29, %s30
    %p32 = scmp.eq.s32.totalorder %s31, 0
    %s34 = sadd.s32 %s33, 1
    %s35 = scalar_select %p32, %s33, %s34
    %p38 = pneg %p32
    %p39 = scmp.eq.s32.totalorder %s9, 1
    %p40 = por %p38, %p39
    %p41 = scmp.ne.s32.totalorder %s33, %s36
    %p42 = scmp.eq.s32.totalorder %s9, 0
    %p43 = por %p41, %p42
    %p44 = scmp.ne.s32.totalorder %s33, %s36
    %p45 = scmp.eq.s32.totalorder %s14, 1
    %p46 = por %p44, %p45
    %p47 = scmp.ne.s32.totalorder %s36, %s37
    %p48 = scmp.eq.s32.totalorder %s14, 0
    %p49 = por %p47, %p48
    %p50 = scmp.ne.s32.totalorder %s36, %s37
    %p51 = scmp.eq.s32.totalorder %s15, 1
    %p52 = por %p50, %p51
    %p54 = scmp.ne.s32.totalorder %s37, %s53
    %p55 = scmp.eq.s32.totalorder %s15, 0
    %p56 = por %p54, %p55
    %s58 = sadd.s32 %s57, 1
    %p61 = scmp.eq.s32.totalorder %s9, 1
    %p62 = scmp.ne.s32.totalorder %s57, %s59
    %p63 = scmp.eq.s32.totalorder %s9, 0
    %p64 = por %p62, %p63
    %p65 = scmp.ne.s32.totalorder %s57, %s59
    %p66 = scmp.eq.s32.totalorder %s14, 1
    %p67 = por %p65, %p66
    %p68 = scmp.ne.s32.totalorder %s59, %s60
    %p69 = scmp.eq.s32.totalorder %s14, 0
    %p70 = por %p68, %p69
    %p71 = scmp.ne.s32.totalorder %s59, %s60
    %p72 = scmp.eq.s32.totalorder %s15, 1
    %p73 = por %p71, %p72
    %p75 = scmp.ne.s32.totalorder %s60, %s74
    %p76 = scmp.eq.s32.totalorder %s15, 0
    %p77 = por %p75, %p76
    %s78 = ssub.s32 %s16, %s28
    %p79 = scmp.eq.s32.totalorder %s78, 0
    %s81 = sadd.s32 %s80, 1
    %s82 = scalar_select %p79, %s80, %s81
    %p85 = pneg %p79
    %p86 = scmp.eq.s32.totalorder %s9, 1
    %p87 = por %p85, %p86
    %p88 = scmp.ne.s32.totalorder %s80, %s83
    %p89 = scmp.eq.s32.totalorder %s9, 0
    %p90 = por %p88, %p89
    %p91 = scmp.ne.s32.totalorder %s80, %s83
    %p92 = scmp.eq.s32.totalorder %s14, 1
    %p93 = por %p91, %p92
    %p94 = scmp.ne.s32.totalorder %s83, %s84
    %p95 = scmp.eq.s32.totalorder %s14, 0
    %p96 = por %p94, %p95
    %p97 = scmp.ne.s32.totalorder %s83, %s84
    %p98 = scmp.eq.s32.totalorder %s15, 1
    %p99 = por %p97, %p98
    %p101 = scmp.ne.s32.totalorder %s84, %s100
    %p102 = scmp.eq.s32.totalorder %s15, 0
    %p103 = por %p101, %p102
    %s104 = ssub.s32 %s17, %s24
    %s105 = ssub.s32 %s16, %s28
    %s106 = sor.u32 %s104, %s105
    %p107 = scmp.eq.s32.totalorder %s106, 0
    %s109 = sadd.s32 %s108, 1
    %s110 = scalar_select %p107, %s108, %s109
    %p113 = pneg %p107
    %p114 = scmp.eq.s32.totalorder %s9, 1
    %p115 = por %p113, %p114
    %p116 = scmp.ne.s32.totalorder %s108, %s111
    %p117 = scmp.eq.s32.totalorder %s9, 0
    %p118 = por %p116, %p117
    %p119 = scmp.ne.s32.totalorder %s108, %s111
    %p120 = scmp.eq.s32.totalorder %s14, 1
    %p121 = por %p119, %p120
    %p122 = scmp.ne.s32.totalorder %s111, %s112
    %p123 = scmp.eq.s32.totalorder %s14, 0
    %p124 = por %p122, %p123
    %p125 = scmp.ne.s32.totalorder %s111, %s112
    %p126 = scmp.eq.s32.totalorder %s15, 1
    %p127 = por %p125, %p126
    %p129 = scmp.ne.s32.totalorder %s112, %s128
    %p130 = scmp.eq.s32.totalorder %s15, 0
    %p131 = por %p129, %p130
    %p132 = scmp.le.s32.totalorder 1, %s9
    %p133 = scmp.lt.s32.totalorder %s9, 3
    %p134 = pnand %p132, %p133
    %p135 = pneg %p134
    // Predicated region
    $region9: #{vit_embedding_forward.1} parent=5 // pred_check
      _
    $region10: #{vit_embedding_forward.1} parent=5 // pred_check_branch
      %137 = sbr.rel (%p134) target = $region12
    $region11: #{vit_embedding_forward.1} parent=5 // pred_region
      %s138 = ssub.s32 %s9, 1
      // Predicated region
      $region13: #{vit_embedding_forward.1} parent=11 // pred_check
        %p139 = pneg %p70
      $region14: #{vit_embedding_forward.1} parent=11 // pred_check_branch
        %141 = sbr.rel (%p139) target = $region16
      $region15: #{vit_embedding_forward.1} parent=11 // pred_region
        _
      $region16: #{vit_embedding_forward.1} parent=11 // pred_fallthru
        _
      // Predicated region
      $region17: #{vit_embedding_forward.1} parent=11 // pred_check
        %p142 = pneg %p96
      $region18: #{vit_embedding_forward.1} parent=11 // pred_check_branch
        %144 = sbr.rel (%p142) target = $region20
      $region19: #{vit_embedding_forward.1} parent=11 // pred_region
        %s145 = smul.u32 3, %s18
        %p146 = scmp.lt.s32.totalorder %s145, 2
        %s147 = scalar_select %p146, %s145, 2
        %s148 = smul.addr %s147, 8
        %s149 = scalar_lea.vmem %s2, %s148
        %s150 = smul.u32 3, %s18
      $region20: #{vit_embedding_forward.1} parent=11 // pred_fallthru
        _
    $region12: #{vit_embedding_forward.1} parent=5 // pred_fallthru
      _
    %p151 = scmp.lt.s32.totalorder %s9, 2
    // Predicated region
    $region21: #{vit_embedding_forward.1} parent=5 // pred_check
      %p152 = pneg %p151
    $region22: #{vit_embedding_forward.1} parent=5 // pred_check_branch
      %154 = sbr.rel (%p152) target = $region24
    $region23: #{vit_embedding_forward.1} parent=5 // pred_region
      // Predicated region
      $region25: #{vit_embedding_forward.1} parent=23 // pred_check
        %p155 = pneg %p43
      $region26: #{vit_embedding_forward.1} parent=23 // pred_check_branch
        %157 = sbr.rel (%p155) target = $region28
      $region27: #{vit_embedding_forward.1} parent=23 // pred_region
        %s158 = smul.u32 3, %s16
        %p159 = scmp.lt.s32.totalorder %s17, 1
        %s160 = scalar_select %p159, %s17, 1
        %p161 = scmp.lt.s32.totalorder %s158, 2
        %s162 = scalar_select %p161, %s158, 2
        %s163 = smul.addr %s160, 3
        %s164 = sadd.s32 %s162, %s163
        %s165 = smul.addr %s164, 4
        %s166 = scalar_lea.vmem %s0, %s165
        %s167 = smul.u32 3, %s16
      $region28: #{vit_embedding_forward.1} parent=23 // pred_fallthru
        _
    $region24: #{vit_embedding_forward.1} parent=5 // pred_fallthru
      _
    %p168 = scmp.le.s32.totalorder 1, %s9
    %p169 = scmp.lt.s32.totalorder %s9, 3
    %p170 = pnand %p168, %p169
    %p171 = pneg %p170
    // Predicated region
    $region29: #{vit_embedding_forward.1} parent=5 // pred_check
      _
    $region30: #{vit_embedding_forward.1} parent=5 // pred_check_branch
      %173 = sbr.rel (%p170) target = $region32
    $region31: #{vit_embedding_forward.1} parent=5 // pred_region
      %s174 = ssub.s32 %s9, 1
      %s175 = smul.u32 3, %s18
      %p176 = scmp.lt.s32.totalorder %s19, 1
      %s177 = scalar_select %p176, %s19, 1
      %p178 = scmp.lt.s32.totalorder %s175, 2
      %s179 = scalar_select %p178, %s175, 2
      %s180 = smul.addr %s177, 3
      %s181 = sadd.s32 %s179, %s180
      %s182 = smul.addr %s181, 4
      %s183 = scalar_lea.vmem %s0, %s182
      %p184 = pneg %p49
      %p185 = pneg %p46
      %p186 = pneg %p70
      %p187 = pneg %p67
      %s188 = smul.u32 3, %s18
      %p189 = scmp.lt.s32.totalorder %s188, 2
      %s190 = scalar_select %p189, %s188, 2
      %s191 = smul.addr %s190, 8
      %s192 = scalar_lea.vmem %s2, %s191
      %p193 = pneg %p96
      %p194 = pneg %p93
      %p195 = pneg %p124
      %p196 = pneg %p121
      %s197 = smul.u32 3, %s18
      %p198 = scmp.lt.s32.totalorder %s19, 1
      %s199 = scalar_select %p198, %s19, 1
      %p200 = scmp.lt.s32.totalorder %s197, 2
      %s201 = scalar_select %p200, %s197, 2
      %s202 = smul.addr %s199, 3
      %s203 = sadd.s32 %s201, %s202
      %s204 = smul.addr %s203, 8
      %s205 = scalar_lea.vmem %s3, %s204
      %s206 = smul.u32 3, %s18
      %p207 = scmp.lt.s32.totalorder %s19, 1
      %s208 = scalar_select %p207, %s19, 1
      %p209 = scmp.lt.s32.totalorder %s206, 2
      %s210 = scalar_select %p209, %s206, 2
      %s211 = smul.addr %s208, 3
      %s212 = sadd.s32 %s210, %s211
      %s213 = smul.addr %s212, 4
      %s214 = scalar_lea.vmem %s0, %s213
      %s215 = smul.u32 3, %s18
      %s216 = smul.u32 3, %s18
      %p217 = scmp.lt.s32.totalorder %s216, 2
      %s218 = scalar_select %p217, %s216, 2
      %s219 = smul.addr %s218, 8
      %s220 = scalar_lea.vmem %s2, %s219
      %s221 = smul.u32 3, %s18
      %s222 = smul.u32 3, %s18
      %p223 = scmp.lt.s32.totalorder %s19, 1
      %s224 = scalar_select %p223, %s19, 1
      %p225 = scmp.lt.s32.totalorder %s222, 2
      %s226 = scalar_select %p225, %s222, 2
      %s227 = smul.addr %s224, 3
      %s228 = sadd.s32 %s226, %s227
      %s229 = smul.addr %s228, 8
      %s230 = scalar_lea.vmem %s3, %s229
      %s231 = smul.u32 3, %s18
      %v233 = vld [vmem:[%s1] sm:$0xf]
      %v234 = vld [vmem:[%s1 + $0x4] sm:$0xf]
      %v235 = vld [vmem:[%s1 + $0x8] sm:$0xf]
      %v236 = vld [vmem:[%s1 + $0xc] sm:$0xf]
      %v237 = vld [vmem:[%s1 + $0x10] sm:$0xf]
      %v238 = vld [vmem:[%s1 + $0x14] sm:$0xf]
      %v239 = vld [vmem:[%s1 + $0x18] sm:$0xf]
      %v240 = vld [vmem:[%s1 + $0x1c] sm:$0xf]
      %v241 = vld [vmem:[%s220] sm:$0xff]
      %v242 = vld [vmem:[%s220 + $0x8] sm:$0xff]
      %v243 = vld [vmem:[%s220 + $0x10] sm:$0xff]
      %v244 = vld [vmem:[%s214] sm:$0xf]
      %v245 = vld [vmem:[%s214 + $0x4] sm:$0xf]
      %v246 = vld [vmem:[%s214 + $0x8] sm:$0xf]
      %v250 = vunpack.c.l.b16 %v244
      %v251 = vunpack.c.l.b16 %v245
      %v252 = vunpack.c.l.b16 %v246
      %v253 = vpack.c.b16 %v251, %v250
      %v254 = vpack.c.b16 %v252, %v252
      %v263 = vunpack.c.l.b16 %v233
      %v264 = vunpack.c.l.b16 %v234
      %v265 = vunpack.c.l.b16 %v235
      %v266 = vunpack.c.l.b16 %v236
      %v267 = vunpack.c.l.b16 %v237
      %v268 = vunpack.c.l.b16 %v238
      %v269 = vunpack.c.l.b16 %v239
      %v270 = vunpack.c.l.b16 %v240
      %v271 = vpack.c.b16 %v264, %v263
      %v272 = vpack.c.b16 %v266, %v265
      %v273 = vpack.c.b16 %v268, %v267
      %v274 = vpack.c.b16 %v270, %v269
      %vm279 = vcmask 523264
      %v281 = vsel %vm279, %v253, 0
      %v284 = vsel %vm279, %v254, 0
      %286 = vmatprep.subr.bf16.mxu0 0
      %287 = vmatpush1.bf16.msra.mxu0 %v271
      %288 = vmatprep.subr.bf16.mxu0 0
      %289 = vmatpush1.bf16.msra.mxu0 %v272
      %290 = vmatprep.subr.bf16.mxu0 0
      %291 = vmatpush1.bf16.msra.mxu0 %v273
      %292 = vmatprep.subr.bf16.mxu0 0
      %293 = vmatpush1.bf16.msra.mxu0 %v274
      %294 = vmatprep.subr.bf16.mxu0 0
      %295 = vmatpush1.bf16.msra.mxu0 0
      %296 = vmatprep.subr.bf16.mxu0 0
      %297 = vmatpush1.bf16.msra.mxu0 0
      %298 = vmatprep.subr.bf16.mxu0 0
      %299 = vmatpush1.bf16.msra.mxu0 0
      %300 = vmatprep.subr.bf16.mxu0 0
      %301 = vmatpush1.bf16.msra.mxu0 0
      %302 = vmatprep.subr.bf16.mxu0 0
      %303 = vmatpush1.bf16.msra.mxu0 0
      %304 = vmatprep.subr.bf16.mxu0 0
      %305 = vmatpush1.bf16.msra.mxu0 0
      %306 = vmatprep.subr.bf16.mxu0 0
      %307 = vmatpush1.bf16.msra.mxu0 0
      %308 = vmatprep.subr.bf16.mxu0 0
      %309 = vmatpush1.bf16.msra.mxu0 0
      %310 = vmatprep.subr.bf16.mxu0 0
      %311 = vmatpush1.bf16.msra.mxu0 0
      %312 = vmatprep.subr.bf16.mxu0 0
      %313 = vmatpush1.bf16.msra.mxu0 0
      %314 = vmatprep.subr.bf16.mxu0 0
      %315 = vmatpush1.bf16.msra.mxu0 0
      %316 = vmatprep.subr.bf16.mxu0 0
      %317 = vmatpush1.bf16.msra.mxu0 0
      %318 = vmatprep.mubr.bf16.mxu0 0
      %319 = vmatmul.mubr.bf16.gmra.mrb[0].mxu0 %v281
      %v320 = vpop.f32.mrb[0].mxu0
      %v321 = vadd.f32 %v241, %v320
      %v322 = vpop.f32.mrb[0].mxu0
      %v323 = vpop.f32.mrb[0].mxu0
      %v324 = vadd.f32 %v242, %v323
      %v325 = vpop.f32.mrb[0].mxu0
      %326 = vmatprep.mubr.bf16.mxu0 0
      %327 = vmatmul.mubr.bf16.gmra.mrb[0].mxu0 %v284
      %v328 = vpop.f32.mrb[0].mxu0
      %v329 = vadd.f32 %v243, %v328
      %v330 = vpop.f32.mrb[0].mxu0
      %v331 = vpop.f32.mrb[0].mxu0
      %v332 = vpop.f32.mrb[0].mxu0
      %333 = vdwg.mxu0
      %vm334 = vcmask 261120
      %335 = vst.msk [vmem:[%s230] sm:$0xff] %vm334, %v321
      %336 = vst.msk [vmem:[%s230 + $0x8] sm:$0xff] %vm334, %v324
      %337 = vst.msk [vmem:[%s230 + $0x10] sm:$0xff] %vm334, %v329
      %s338 = smul.u32 3, %s18
      %p339 = scmp.lt.s32.totalorder %s19, 1
      %s340 = scalar_select %p339, %s19, 1
      %p341 = scmp.lt.s32.totalorder %s338, 2
      %s342 = scalar_select %p341, %s338, 2
      %s343 = smul.addr %s340, 3
      %s344 = sadd.s32 %s342, %s343
      %s345 = smul.addr %s344, 8
      %s346 = scalar_lea.vmem %s3, %s345
      // Predicated region
      $region33: #{vit_embedding_forward.1} parent=31 // pred_check
        %p347 = pneg %p121
      $region34: #{vit_embedding_forward.1} parent=31 // pred_check_branch
        %349 = sbr.rel (%p347) target = $region36
      $region35: #{vit_embedding_forward.1} parent=31 // pred_region
        %s350 = smul.u32 3, %s18
      $region36: #{vit_embedding_forward.1} parent=31 // pred_fallthru
        _
    $region32: #{vit_embedding_forward.1} parent=5 // pred_fallthru
      _
    %p351 = scmp.le.s32.totalorder 2, %s9
    // Predicated region
    $region37: #{vit_embedding_forward.1} parent=5 // pred_check
      %p352 = pneg %p351
    $region38: #{vit_embedding_forward.1} parent=5 // pred_check_branch
      %354 = sbr.rel (%p352) target = $region40
    $region39: #{vit_embedding_forward.1} parent=5 // pred_region
      %s355 = ssub.s32 %s9, 2
      // Predicated region
      $region41: #{vit_embedding_forward.1} parent=39 // pred_check
        %p356 = pneg %p127
      $region42: #{vit_embedding_forward.1} parent=39 // pred_check_branch
        %358 = sbr.rel (%p356) target = $region44
      $region43: #{vit_embedding_forward.1} parent=39 // pred_region
        %s359 = smul.u32 3, %s20
        %p360 = scmp.lt.s32.totalorder %s21, 1
        %s361 = scalar_select %p360, %s21, 1
        %p362 = scmp.lt.s32.totalorder %s359, 2
        %s363 = scalar_select %p362, %s359, 2
        %s364 = smul.addr %s361, 3
        %s365 = sadd.s32 %s363, %s364
        %s366 = smul.addr %s365, 8
        %s367 = scalar_lea.vmem %s3, %s366
      $region44: #{vit_embedding_forward.1} parent=39 // pred_fallthru
        _
    $region40: #{vit_embedding_forward.1} parent=5 // pred_fallthru
      _
  $region6: #{vit_embedding_forward.1} parent=0 // loop_footer
    %s13 = sadd.s32 1, %s9
  $region7: #{vit_embedding_forward.1} parent=0 // loop_footer_branch
    %8 = sbr.rel target = $region3
  $region8: #{vit_embedding_forward.1} parent=0 // loop_exit
    _

</llo_original>
